<compile_context>
chip_gen: v5e
topology: v5e:2x2
jax: 0.10.0
libtpu: 0.0.40
codegen_flags: <defaults>
</compile_context>

<pallas_src>
import functools

import jax
import jax.numpy as jnp
from jax.experimental import pallas as pl
from jax.experimental.pallas import tpu as pltpu


def _shift_append_kernel(buf_ref, in_ref, out_ref, *, keep, chunk_lanes):
    # buf_ref/out_ref: (rows, L) with L = keep + chunk_lanes; in_ref: (rows, chunk_lanes)
    # new_row = [ old_row[chunk_lanes:], input_row ]
    out_ref[:, :keep] = buf_ref[:, chunk_lanes:]
    out_ref[:, keep:] = in_ref[...]


def _pick_row_tile(G, L, CL, itemsize, budget=8 * 1024 * 1024):
    """Largest row tile (== G, or a multiple-of-8 divisor of G) whose
    double-buffered in/out blocks fit `budget` bytes of VMEM."""
    per_row = 2 * (2 * L + CL) * itemsize
    max_rows = max(1, budget // per_row)
    if G <= max_rows:
        return G                            # single block covers the whole array
    t = (max_rows // 8) * 8
    while t >= 8:
        if G % t == 0:
            return t
        t -= 8
    return G                                # no aligned divisor: one big block


@functools.partial(jax.jit, static_argnames=("row_tile",), donate_argnums=(0,))
def _time_delay_step(state2d, x2d, *, row_tile):
    """new_state[g, :] = concat(state[g, CL:], x[g, :]) for every row g."""
    G, L = state2d.shape
    CL = x2d.shape[1]
    keep = L - CL
    assert 0 < keep and 0 < CL and G % row_tile == 0

    kernel = functools.partial(_shift_append_kernel, keep=keep, chunk_lanes=CL)

    # Only raise the VMEM limit if a forced-large block would need it.
    est_vmem = 2 * row_tile * (2 * L + CL) * state2d.dtype.itemsize
    cp_kwargs = {"dimension_semantics": ("parallel",)}
    if est_vmem > 12 * 1024 * 1024:
        cp_kwargs["vmem_limit_bytes"] = int(min(est_vmem + (4 << 20), 48 << 20))

    return pl.pallas_call(
        kernel,
        out_shape=jax.ShapeDtypeStruct((G, L), state2d.dtype),
        grid_spec=pltpu.PrefetchScalarGridSpec(
            num_scalar_prefetch=0,
            grid=(G // row_tile,),
            in_specs=[
                pl.BlockSpec((row_tile, L), lambda g: (g, 0)),
                pl.BlockSpec((row_tile, CL), lambda g: (g, 0)),
            ],
            out_specs=pl.BlockSpec((row_tile, L), lambda g: (g, 0)),
        ),
        # Old buffer HBM is donated to the new buffer (read-before-write per block).
        input_output_aliases={0: 0},
        compiler_params=pltpu.CompilerParams(**cp_kwargs),
    )(state2d, x2d)


class TimeDelay:
    """Functional JAX/Pallas port of tal_audio.models.ns.dpcrn.TimeDelay."""

    def __init__(self, buffer_shape, dim=1, chunk_size=1):
        assert dim in (1, 2), "TimeDelay supports dim=1 or dim=2 only"
        self.dim = dim
        self.chunk_size = int(chunk_size)
        self.buffer_shape = tuple(int(s) for s in buffer_shape)
        self._dtype = jnp.float32

        d = dim
        G = 1
        for s in self.buffer_shape[:d]:
            G *= s
        F = 1
        for s in self.buffer_shape[d + 1:]:
            F *= s
        self._G, self._F = G, F
        self._T = self.buffer_shape[d]
        # canonical lane-dense 2-D state [G, T*F]
        self._state2d = jnp.zeros((G, self._T * F), dtype=self._dtype)
        self.buffer = self._state2d.reshape(self.buffer_shape)

    def load_state(self, buffer):
        """Replace the internal buffer state (shape must match except maybe time dim)."""
        buffer = jnp.asarray(buffer, dtype=self._dtype)
        d = self.dim
        shp = tuple(buffer.shape)
        assert shp[:d] == self.buffer_shape[:d]
        assert shp[d + 1:] == self.buffer_shape[d + 1:]
        self._T = shp[d]
        self._state2d = buffer.reshape(self._G, self._T * self._F)
        self.buffer = buffer

    def __call__(self, x):
        d, F, G = self.dim, self._F, self._G
        T = self._T
        Cin = int(x.shape[d])
        x2d = jnp.asarray(x, dtype=self._dtype).reshape(G, Cin * F)

        keep_t = max(T - self.chunk_size, 0)
        new_T = keep_t + Cin
        L = T * F

        if keep_t == 0:
            # history is empty -> new buffer is just the input (matches torch.cat)
            new2d = x2d
        elif new_T == T:
            # steady-state streaming path: Pallas shift-and-append with in-place HBM reuse
            row_tile = _pick_row_tile(G, L, Cin * F, jnp.dtype(self._dtype).itemsize)
            new2d = _time_delay_step(self._state2d, x2d, row_tile=row_tile)
        else:
            # input length != chunk_size -> buffer length changes; rare path, no kernel
            new2d = jnp.concatenate(
                [self._state2d[:, self.chunk_size * F:], x2d], axis=1)

        self._T = new_T
        self._state2d = new2d
        out_shape = self.buffer_shape[:d] + (new_T,) + self.buffer_shape[d + 1:]
        out = new2d.reshape(out_shape)
        self.buffer = out
        return out


def _reference(buffer, x, dim, chunk_size):
    if dim == 1:
        hist = buffer[:, chunk_size:, ...]
    else:
        hist = buffer[:, :, chunk_size:, ...]
    return jnp.concatenate([hist, x], axis=dim)


if __name__ == "__main__":
    key = jax.random.PRNGKey(0)
    k1, k2, k3, k4 = jax.random.split(key, 4)

    # ---- dim=1 case: buffer [B, T, F] = [2, 16, 32], chunk 4 ----
    B, T, F = 2, 16, 32
    chunk = 4
    td1 = TimeDelay((B, T, F), dim=1, chunk_size=chunk)
    init1 = jax.random.normal(k1, (B, T, F), dtype=jnp.float32)
    td1.load_state(init1)
    x1 = jax.random.normal(k2, (B, chunk, F), dtype=jnp.float32)

    exp1 = jax.block_until_ready(_reference(init1, x1, dim=1, chunk_size=chunk))
    out1 = jax.block_until_ready(td1(x1))
    assert out1.shape == (B, T, F)
    assert jnp.allclose(out1, exp1), "dim=1 step-1 mismatch"

    # second step: state carries over
    x1b = jax.random.normal(k3, (B, chunk, F), dtype=jnp.float32)
    exp1b = jax.block_until_ready(_reference(exp1, x1b, dim=1, chunk_size=chunk))
    out1b = jax.block_until_ready(td1(x1b))
    assert jnp.allclose(out1b, exp1b), "dim=1 step-2 mismatch"

    # ---- dim=2 case: buffer [B, C, T, F] = [2, 4, 8, 16], chunk 2 ----
    Bc, Ch, Tt, Ff = 2, 4, 8, 16
    chunk2 = 2
    td2 = TimeDelay((Bc, Ch, Tt, Ff), dim=2, chunk_size=chunk2)
    init2 = jax.random.normal(k2, (Bc, Ch, Tt, Ff), dtype=jnp.float32)
    td2.load_state(init2)
    x2 = jax.random.normal(k4, (Bc, Ch, chunk2, Ff), dtype=jnp.float32)

    exp2 = jax.block_until_ready(_reference(init2, x2, dim=2, chunk_size=chunk2))
    out2 = jax.block_until_ready(td2(x2))
    assert out2.shape == (Bc, Ch, Tt, Ff)
    assert jnp.allclose(out2, exp2), "dim=2 mismatch"

    print("KERNEL_OK")
</pallas_src>

<mosaic_0001>
module attributes {stable_mosaic.version = 11 : i64} {
  func.func @_shift_append_kernel(%arg0: i32, %arg1: memref<2x512xf32, #tpu.memory_space<vmem>>, %arg2: memref<2x128xf32, #tpu.memory_space<vmem>>, %arg3: memref<2x512xf32, #tpu.memory_space<vmem>>) attributes {dimension_semantics = [#tpu.dimension_semantics<parallel>], iteration_bounds = array<i64: 1>, scalar_prefetch = 0 : i64, scratch_operands = 0 : i64, tpu.core_type = #tpu.core_type<tc>, window_params = [{transform_indices = @transform_0, window_bounds = array<i64: 2, 512>}, {transform_indices = @transform_1, window_bounds = array<i64: 2, 128>}, {transform_indices = @transform_2, window_bounds = array<i64: 2, 512>}]} {
    %c0 = arith.constant 0 : index
    %c128 = arith.constant 128 : index
    %0 = vector.load %arg1[%c0, %c128] : memref<2x512xf32, #tpu.memory_space<vmem>>, vector<2x384xf32>
    %c0_0 = arith.constant 0 : index
    %c0_1 = arith.constant 0 : index
    %1 = vector.load %arg3[%c0_0, %c0_1] : memref<2x512xf32, #tpu.memory_space<vmem>>, vector<2x384xf32>
    tpu.vector_store %arg3[%c0_0, %c0_1], %0 {strides = array<i32>} : memref<2x512xf32, #tpu.memory_space<vmem>>, vector<2x384xf32>,
    %c0_2 = arith.constant 0 : index
    %c0_3 = arith.constant 0 : index
    %2 = vector.load %arg2[%c0_2, %c0_3] : memref<2x128xf32, #tpu.memory_space<vmem>>, vector<2x128xf32>
    %c0_4 = arith.constant 0 : index
    %c384 = arith.constant 384 : index
    %3 = vector.load %arg3[%c0_4, %c384] : memref<2x512xf32, #tpu.memory_space<vmem>>, vector<2x128xf32>
    tpu.vector_store %arg3[%c0_4, %c384], %2 {strides = array<i32>} : memref<2x512xf32, #tpu.memory_space<vmem>>, vector<2x128xf32>,
    return
  }
  func.func @transform_0(%arg0: i32) -> (i32, i32) {
    %c0_i32 = arith.constant 0 : i32
    %c0_i32_0 = arith.constant 0 : i32
    return %arg0, %c0_i32 : i32, i32
  }
  func.func @transform_1(%arg0: i32) -> (i32, i32) {
    %c0_i32 = arith.constant 0 : i32
    %c0_i32_0 = arith.constant 0 : i32
    return %arg0, %c0_i32 : i32, i32
  }
  func.func @transform_2(%arg0: i32) -> (i32, i32) {
    %c0_i32 = arith.constant 0 : i32
    %c0_i32_0 = arith.constant 0 : i32
    return %arg0, %c0_i32 : i32, i32
  }
}

</mosaic_0001>

<llo_original>
// kernel: _time_delay_step.1
$region0: #{_time_delay_step.1}
  #allocation0 [shape = 'u32[]', space=smem, size = 0x4, offset = 0x4, fixed_abs, tag = 'smem constant byte address 0x4 - core index']
  #allocation1 [shape = 'u32[72,128]{1,0:T(1,128)}', space=vmem, size = 0x9000, scoped, tag = 'internal scratch']
  %s0 = inlined_call_operand.hbm [shape: f32[2,512], index: 0, kind: input, shape index: {}, may-alias: {0,2}]
  %s1 = inlined_call_operand.hbm [shape: f32[2,128], index: 1, kind: input, shape index: {}]
  %s2 = inlined_call_operand.hbm [shape: f32[2,512], index: 2, kind: output, shape index: {}, may-alias: {0,2}]
  %s3 = sld [smem:[#allocation0]]
  $region26: #{_time_delay_step.1} parent=0
    _
  %s5 = ssub.s32 1, %s3
  %s6 = scalar_select 0, %s5, %s3
  $region1: #{_time_delay_step.1} parent=0
    #allocation2 [shape = 'u8[4096]{0}', space=vmem, size = 0x1000, scoped, tag = 'input window, operand 0, single buffered']
    #allocation3 [shape = 's32[1]{0}', space=sflag, size = 0x4, scoped, tag = 'scoped memory for _time_delay_step.1']
    #allocation4 [shape = 's32[1]{0}', space=sflag, size = 0x4, scoped, tag = 'scoped memory for _time_delay_step.1']
    #allocation5 [shape = 'u8[1024]{0}', space=vmem, size = 0x400, scoped, tag = 'input window, operand 1, single buffered']
    #allocation6 [shape = 's32[1]{0}', space=sflag, size = 0x4, scoped, tag = 'scoped memory for _time_delay_step.1']
    #allocation7 [shape = 'u8[4096]{0}', space=vmem, size = 0x1000, scoped, tag = 'output window, operand 0, single buffered']
    %7 = vsyncpa [#allocation3], 0
    %8 = vsyncpa [#allocation6], 0
    %9 = vsyncpa [#allocation4], 0
    // Predicated region
    $region2: #{_time_delay_step.1} parent=1 // pred_check
      _
    $region3: #{_time_delay_step.1} parent=1 // pred_check_branch
      %11 = sbr.rel (0) target = $region5
    $region4: #{_time_delay_step.1} parent=1 // pred_region
      %13 = vsyncadd [#allocation3], 0
      %s15 = sshll.u32 %s0, 4
      %s16 = int_to_ptr.hbm [resolvable:$true] %s15
      %s17 = sshll.u32 [#allocation2], 4
      %s18 = int_to_ptr.vmem [resolvable:$true] %s17
      %20 = dma.hbm_to_vmem [thread:$0]  %s16, 128, %s18, [#allocation3]
    $region5: #{_time_delay_step.1} parent=1 // pred_fallthru
      _
    // Predicated region
    $region6: #{_time_delay_step.1} parent=1 // pred_check
      _
    $region7: #{_time_delay_step.1} parent=1 // pred_check_branch
      %22 = sbr.rel (0) target = $region9
    $region8: #{_time_delay_step.1} parent=1 // pred_region
      %24 = vsyncadd [#allocation6], 0
      %s26 = sshll.u32 %s1, 4
      %s27 = int_to_ptr.hbm [resolvable:$true] %s26
      %s28 = sshll.u32 [#allocation5], 4
      %s29 = int_to_ptr.vmem [resolvable:$true] %s28
      %31 = dma.hbm_to_vmem [thread:$0]  %s27, 32, %s29, [#allocation6]
    $region9: #{_time_delay_step.1} parent=1 // pred_fallthru
      _
    // Predicated region
    $region10: #{_time_delay_step.1} parent=1 // pred_check
      _
    $region11: #{_time_delay_step.1} parent=1 // pred_check_branch
      %33 = sbr.rel (0) target = $region13
    $region12: #{_time_delay_step.1} parent=1 // pred_region
      %35 = dma.done [#allocation3], 128
    $region13: #{_time_delay_step.1} parent=1 // pred_fallthru
      _
    // Predicated region
    $region14: #{_time_delay_step.1} parent=1 // pred_check
      _
    $region15: #{_time_delay_step.1} parent=1 // pred_check_branch
      %37 = sbr.rel (0) target = $region17
    $region16: #{_time_delay_step.1} parent=1 // pred_region
      %39 = dma.done [#allocation6], 32
    $region17: #{_time_delay_step.1} parent=1 // pred_fallthru
      _
    %v40 = vld [vmem:[#allocation2 + $0x2] sm:$0x3f]
    %41 = vst [vmem:[#allocation7] sm:$0x3f] %v40
    %v42 = vld [vmem:[#allocation5] sm:$0x3]
    %43 = vst [vmem:[#allocation7 + $0x6] sm:$0x3] %v42
    // Predicated region
    $region18: #{_time_delay_step.1} parent=1 // pred_check
      _
    $region19: #{_time_delay_step.1} parent=1 // pred_check_branch
      %45 = sbr.rel (0) target = $region21
    $region20: #{_time_delay_step.1} parent=1 // pred_region
      %47 = vsyncadd [#allocation4], 0
      %s49 = sshll.u32 [#allocation7], 4
      %s50 = int_to_ptr.vmem [resolvable:$true] %s49
      %s51 = sshll.u32 %s2, 4
      %s52 = int_to_ptr.hbm [resolvable:$true] %s51
      %54 = dma.vmem_to_hbm [thread:$0]  %s50, 128, %s52, [#allocation4]
    $region21: #{_time_delay_step.1} parent=1 // pred_fallthru
      _
    // Predicated region
    $region22: #{_time_delay_step.1} parent=1 // pred_check
      _
    $region23: #{_time_delay_step.1} parent=1 // pred_check_branch
      %56 = sbr.rel (0) target = $region25
    $region24: #{_time_delay_step.1} parent=1 // pred_region
      %58 = dma.done [#allocation4], 128
    $region25: #{_time_delay_step.1} parent=1 // pred_fallthru
      _
    %59 = vsyncpa [#allocation3], 1
    %60 = vsyncpa [#allocation6], 1
    %61 = vsyncpa [#allocation4], 1

</llo_original>
